<compile_context>
chip_gen: v7x
topology: tpu7x:2x2x1
jax: 0.10.0
libtpu: 0.0.40
codegen_flags: <defaults>
</compile_context>

<pallas_src>
import functools

import jax
import jax.numpy as jnp
from jax.experimental import pallas as pl
from jax.experimental.pallas import tpu as pltpu


def _aspp_pool_kernel(x_ref, w_ref, shift_ref, o_ref, acc_ref, *, ck, cin):
    # x_ref:     (NB, CK, HW)   batch-block x Cin-tile x flattened spatial
    # w_ref:     (Cin, Cout)    resident folded weight = W^T * bn_scale / (H*W)
    # shift_ref: (1, Cout)      folded BN shift = beta - mean * scale
    # o_ref:     (NB, 1, Cout)  pooled + BN + ReLU result (broadcast done outside)
    # acc_ref:   (NB, Cout)     f32 accumulator (persists across the k axis)
    k = pl.program_id(1)

    @pl.when(k == 0)
    def _init():
        acc_ref[...] = jnp.zeros_like(acc_ref)

    # Partial spatial sum over the lane axis, accumulated in f32 without
    # materializing an f32 copy of the whole slab.
    part = jnp.sum(x_ref[...], axis=-1, dtype=jnp.float32)            # (NB, CK)

    if ck == cin:
        w_blk = w_ref[...]                                            # (Cin, Cout)
    else:
        start = pl.multiple_of(k * ck, 8)
        w_blk = w_ref[pl.ds(start, ck), :]                            # (CK, Cout)

    acc_ref[...] += jnp.dot(part, w_blk,
                            preferred_element_type=jnp.float32)       # (NB, Cout)

    @pl.when(k == pl.num_programs(1) - 1)
    def _finalize():
        y = jnp.maximum(acc_ref[...] + shift_ref[...], 0.0)           # (NB, Cout)
        o_ref[...] = y[:, None, :].astype(o_ref.dtype)                # (NB, 1, Cout)


def _vmem_capacity_bytes():
    """Generation-aware VMEM capacity; conservative 64 MiB fallback."""
    try:
        return int(pltpu.get_tpu_info().vmem_capacity_bytes)
    except Exception:
        return 64 * 1024 * 1024


def _choose_tiles(N, Cin, Cout, HW, in_itemsize, out_itemsize, vmem_budget):
    """Pick (NB, Cin_tile) so the double-buffered footprint fits the budget.

    Preference order: largest Cin tile first (collapses the reduction axis),
    then the largest batch block.  nb is capped at N//2 so the parallel grid
    axis has >= 2 steps (both v7x TensorCores get work)."""
    nb_cap = N if N < 2 else max(1, N // 2)
    nb_cap = min(nb_cap, 32)
    nb_candidates = [d for d in range(nb_cap, 0, -1) if N % d == 0]
    if not nb_candidates:
        nb_candidates = [1]

    # Dtype-aware sublane alignment: f32 -> 8, bf16 -> 16, int8/fp8 -> 32.
    sublane_mult = 8 * (4 // max(1, in_itemsize))
    ck_candidates = [Cin] + [d for d in range(Cin - 1, 0, -1)
                             if Cin % d == 0 and d % sublane_mult == 0]

    def need_bytes(nb, ck):
        return (2 * nb * ck * HW * in_itemsize      # double-buffered input tile
                + 2 * Cin * Cout * 4                # resident folded weight
                + 2 * Cout * 4                      # shift
                + 2 * nb * Cout * out_itemsize      # pooled output (tiny)
                + nb * Cout * 4)                    # f32 accumulator scratch

    for ck in ck_candidates:                        # biggest Cin tile first
        for nb in nb_candidates:                    # then biggest batch block
            need = need_bytes(nb, ck)
            if need <= vmem_budget:
                return nb, ck, need
    nb, ck = nb_candidates[-1], ck_candidates[-1]
    return nb, ck, need_bytes(nb, ck)


def aspp_pooling(x, conv_w, bn_gamma, bn_beta, bn_mean, bn_var,
                 eps=1e-5, out_dtype=None):
    """x: (N, Cin, H, W) NCHW. conv_w: (Cout, Cin, 1, 1). Returns (N, Cout, H, W).

    out_dtype lets callers request e.g. bf16 output (recommended on v5e, where
    the broadcast writeback is the bandwidth-dominant term)."""
    N, Cin, H, W = x.shape
    Cout = conv_w.shape[0]
    HW = H * W
    out_dtype = x.dtype if out_dtype is None else jnp.dtype(out_dtype)

    # Fold BN (eval mode) and the 1/(H*W) mean divisor into a pre-transposed
    # weight:  mean(x) @ W^T * scale  ==  sum(x) @ (W^T * scale / (H*W)).
    scale = (bn_gamma / jnp.sqrt(bn_var + eps)).astype(jnp.float32)        # (Cout,)
    shift = (bn_beta - bn_mean * scale).reshape(1, Cout).astype(jnp.float32)
    w_folded = (conv_w.reshape(Cout, Cin).T.astype(jnp.float32)
                * scale[None, :] / float(HW))                              # (Cin, Cout)

    # Lane-dense layout: flatten H, W onto the last (lane) axis. Contiguous
    # NCHW reshape is free.  The block's last dim equals the full HW extent,
    # so any H*W (including 33x33 / 65x65) is a legal, contiguous DMA.
    x3 = x.reshape(N, Cin, HW)

    cap = _vmem_capacity_bytes()
    budget = int(0.72 * cap)
    nb, ck, vmem_need = _choose_tiles(
        N, Cin, Cout, HW, x.dtype.itemsize, jnp.dtype(out_dtype).itemsize,
        vmem_budget=budget)

    headroom = 8 << 20
    if vmem_need + (2 << 20) > cap - headroom:
        raise ValueError(
            f"aspp_pooling: minimal block footprint {vmem_need} B exceeds the "
            f"usable VMEM ({cap - headroom} B); shape N={N}, Cin={Cin}, "
            f"Cout={Cout}, HW={HW} is too large for this kernel.")
    vmem_limit = int(min(cap - headroom, max(32 << 20, vmem_need + (4 << 20))))

    grid = (N // nb, Cin // ck)

    cost = pl.CostEstimate(
        flops=int(2 * N * Cin * Cout + 2 * N * Cin * HW),
        transcendentals=0,
        bytes_accessed=int(N * Cin * HW * x.dtype.itemsize
                           + N * Cout * jnp.dtype(out_dtype).itemsize
                           + Cin * Cout * 4 + Cout * 4),
    )

    kernel = functools.partial(_aspp_pool_kernel, ck=ck, cin=Cin)

    pooled3 = pl.pallas_call(
        kernel,
        out_shape=jax.ShapeDtypeStruct((N, 1, Cout), out_dtype),
        grid_spec=pltpu.PrefetchScalarGridSpec(
            num_scalar_prefetch=0,
            grid=grid,
            in_specs=[
                pl.BlockSpec((nb, ck, HW), lambda n, k: (n, k, 0)),
                # Full folded weight, constant index map -> fetched once,
                # stays VMEM-resident across the whole grid.
                pl.BlockSpec((Cin, Cout), lambda n, k: (0, 0)),
                pl.BlockSpec((1, Cout), lambda n, k: (0, 0)),
            ],
            out_specs=pl.BlockSpec((nb, 1, Cout), lambda n, k: (n, 0, 0)),
            scratch_shapes=[pltpu.VMEM((nb, Cout), jnp.float32)],
        ),
        compiler_params=pltpu.CompilerParams(
            dimension_semantics=("parallel", "arbitrary"),
            vmem_limit_bytes=vmem_limit,
        ),
        cost_estimate=cost,
    )(x3, w_folded, shift)

    # Bilinear upsample from a 1x1 source with align_corners=True is a pure
    # broadcast over H, W; per perf review it is done outside the kernel
    # pipeline (it would otherwise dominate the VMEM footprint).
    pooled = pooled3.reshape(N, Cout)
    return jnp.broadcast_to(pooled[:, :, None, None], (N, Cout, H, W))


def _reference(x, conv_w, bn_gamma, bn_beta, bn_mean, bn_var, eps=1e-5):
    N, Cin, H, W = x.shape
    Cout = conv_w.shape[0]
    pooled = jnp.mean(x, axis=(2, 3))                       # (N, Cin)
    y = pooled @ conv_w.reshape(Cout, Cin).T                # (N, Cout)
    y = (y - bn_mean) / jnp.sqrt(bn_var + eps) * bn_gamma + bn_beta
    y = jnp.maximum(y, 0.0)
    return jnp.broadcast_to(y[:, :, None, None], (N, Cout, H, W))


if __name__ == "__main__":
    key = jax.random.PRNGKey(0)
    k_x, k_w, k_g, k_b, k_m, k_v = jax.random.split(key, 6)

    N, Cin, Cout, H, W = 2, 4, 4, 16, 16
    x = jax.random.normal(k_x, (N, Cin, H, W), dtype=jnp.float32)
    conv_w = jax.random.normal(k_w, (Cout, Cin, 1, 1), dtype=jnp.float32) * 0.1
    bn_gamma = jax.random.uniform(k_g, (Cout,), minval=0.5, maxval=1.5)
    bn_beta = jax.random.normal(k_b, (Cout,)) * 0.1
    bn_mean = jax.random.normal(k_m, (Cout,)) * 0.05
    bn_var = jax.random.uniform(k_v, (Cout,), minval=0.5, maxval=1.5)

    out = aspp_pooling(x, conv_w, bn_gamma, bn_beta, bn_mean, bn_var)
    out = jax.block_until_ready(out)

    ref = _reference(x, conv_w, bn_gamma, bn_beta, bn_mean, bn_var)
    assert out.shape == (N, Cout, H, W)
    assert jnp.allclose(out, ref, atol=1e-4, rtol=1e-4), \
        float(jnp.max(jnp.abs(out - ref)))

    print("KERNEL_OK")
</pallas_src>

<mosaic_0001>
module attributes {stable_mosaic.version = 11 : i64} {
  func.func @_aspp_pool_kernel(%arg0: i32, %arg1: i32, %arg2: memref<1x4x256xf32, #tpu.memory_space<vmem>>, %arg3: memref<4x4xf32, #tpu.memory_space<vmem>>, %arg4: memref<1x4xf32, #tpu.memory_space<vmem>>, %arg5: memref<1x1x4xf32, #tpu.memory_space<vmem>>, %arg6: memref<1x4xf32, #tpu.memory_space<vmem>>) attributes {dimension_semantics = [#tpu.dimension_semantics<parallel>, #tpu.dimension_semantics<arbitrary>], iteration_bounds = array<i64: 2, 1>, scalar_prefetch = 0 : i64, scratch_operands = 1 : i64, tpu.core_type = #tpu.core_type<tc>, window_params = [{transform_indices = @transform_0, window_bounds = array<i64: 1, 4, 256>}, {pipeline_mode = #tpu.pipeline_mode<synchronous>, transform_indices = @transform_1, window_bounds = array<i64: 4, 4>}, {pipeline_mode = #tpu.pipeline_mode<synchronous>, transform_indices = @transform_2, window_bounds = array<i64: 1, 4>}, {transform_indices = @transform_3, window_bounds = array<i64: 1, 1, 4>}]} {
    %c0_i32 = arith.constant 0 : i32
    %0 = arith.cmpi eq, %arg1, %c0_i32 : i32
    %1 = arith.extui %0 : i1 to i32
    %c0_i32_0 = arith.constant 0 : i32
    %2 = arith.cmpi ne, %1, %c0_i32_0 : i32
    scf.if %2 {
      %cst_12 = arith.constant 0.000000e+00 : f32
      %13 = vector.broadcast %cst_12 : f32 to vector<1x4xf32>
      %c0_13 = arith.constant 0 : index
      %c0_14 = arith.constant 0 : index
      %14 = vector.load %arg6[%c0_13, %c0_14] : memref<1x4xf32, #tpu.memory_space<vmem>>, vector<1x4xf32>
      tpu.vector_store %arg6[%c0_13, %c0_14], %13 {strides = array<i32>} : memref<1x4xf32, #tpu.memory_space<vmem>>, vector<1x4xf32>,
    } else {
    }
    %c0 = arith.constant 0 : index
    %c0_1 = arith.constant 0 : index
    %c0_2 = arith.constant 0 : index
    %3 = vector.load %arg2[%c0, %c0_1, %c0_2] : memref<1x4x256xf32, #tpu.memory_space<vmem>>, vector<1x4x256xf32>
    %cst = arith.constant dense<0.000000e+00> : vector<1x4xf32>
    %4 = vector.multi_reduction <add>, %3, %cst [2] : vector<1x4x256xf32> to vector<1x4xf32>
    %c0_3 = arith.constant 0 : index
    %c0_4 = arith.constant 0 : index
    %5 = vector.load %arg3[%c0_3, %c0_4] : memref<4x4xf32, #tpu.memory_space<vmem>>, vector<4x4xf32>
    %c0_5 = arith.constant 0 : index
    %c0_6 = arith.constant 0 : index
    %6 = vector.load %arg6[%c0_5, %c0_6] : memref<1x4xf32, #tpu.memory_space<vmem>>, vector<1x4xf32>
    %cst_7 = arith.constant dense<0.000000e+00> : vector<1x4xf32>
    %7 = tpu.matmul %4, %5, %cst_7 {dimension_numbers = #tpu.dot_dimension_numbers<[1], [0], [0], [1], [0, 0, 1, 1], [], []>} : vector<1x4xf32>, vector<4x4xf32>, vector<1x4xf32> -> vector<1x4xf32>
    %8 = arith.addf %6, %7 : vector<1x4xf32>
    %c0_8 = arith.constant 0 : index
    %c0_9 = arith.constant 0 : index
    %9 = vector.load %arg6[%c0_8, %c0_9] : memref<1x4xf32, #tpu.memory_space<vmem>>, vector<1x4xf32>
    tpu.vector_store %arg6[%c0_8, %c0_9], %8 {strides = array<i32>} : memref<1x4xf32, #tpu.memory_space<vmem>>, vector<1x4xf32>,
    %c0_i32_10 = arith.constant 0 : i32
    %10 = arith.cmpi eq, %arg1, %c0_i32_10 : i32
    %11 = arith.extui %10 : i1 to i32
    %c0_i32_11 = arith.constant 0 : i32
    %12 = arith.cmpi ne, %11, %c0_i32_11 : i32
    scf.if %12 {
      %c0_12 = arith.constant 0 : index
      %c0_13 = arith.constant 0 : index
      %13 = vector.load %arg6[%c0_12, %c0_13] : memref<1x4xf32, #tpu.memory_space<vmem>>, vector<1x4xf32>
      %c0_14 = arith.constant 0 : index
      %c0_15 = arith.constant 0 : index
      %14 = vector.load %arg4[%c0_14, %c0_15] : memref<1x4xf32, #tpu.memory_space<vmem>>, vector<1x4xf32>
      %15 = arith.addf %13, %14 : vector<1x4xf32>
      %cst_16 = arith.constant 0.000000e+00 : f32
      %16 = vector.broadcast %cst_16 : f32 to vector<1x4xf32>
      %17 = arith.maximumf %15, %16 : vector<1x4xf32>
      %18 = vector.shape_cast %17 : vector<1x4xf32> to vector<1x1x4xf32>
      %c0_17 = arith.constant 0 : index
      %c0_18 = arith.constant 0 : index
      %c0_19 = arith.constant 0 : index
      %19 = vector.load %arg5[%c0_17, %c0_18, %c0_19] : memref<1x1x4xf32, #tpu.memory_space<vmem>>, vector<1x1x4xf32>
      tpu.vector_store %arg5[%c0_17, %c0_18, %c0_19], %18 {strides = array<i32>} : memref<1x1x4xf32, #tpu.memory_space<vmem>>, vector<1x1x4xf32>,
    } else {
    }
    return
  }
  func.func @transform_0(%arg0: i32, %arg1: i32) -> (i32, i32, i32) {
    %c0_i32 = arith.constant 0 : i32
    %c0_i32_0 = arith.constant 0 : i32
    return %arg0, %arg1, %c0_i32 : i32, i32, i32
  }
  func.func @transform_1(%arg0: i32, %arg1: i32) -> (i32, i32) {
    %c0_i32 = arith.constant 0 : i32
    %c0_i32_0 = arith.constant 0 : i32
    %c0_i32_1 = arith.constant 0 : i32
    return %c0_i32, %c0_i32_0 : i32, i32
  }
  func.func @transform_2(%arg0: i32, %arg1: i32) -> (i32, i32) {
    %c0_i32 = arith.constant 0 : i32
    %c0_i32_0 = arith.constant 0 : i32
    %c0_i32_1 = arith.constant 0 : i32
    return %c0_i32, %c0_i32_0 : i32, i32
  }
  func.func @transform_3(%arg0: i32, %arg1: i32) -> (i32, i32, i32) {
    %c0_i32 = arith.constant 0 : i32
    %c0_i32_0 = arith.constant 0 : i32
    %c0_i32_1 = arith.constant 0 : i32
    return %arg0, %c0_i32, %c0_i32_0 : i32, i32, i32
  }
}

</mosaic_0001>

<llo_original>
// kernel: tpu_custom_call.1
$region0: #{tpu_custom_call.1}
  #allocation0 [shape = 'u32[]', space=smem, size = 0x4, offset = 0x4, fixed_abs, tag = 'smem constant byte address 0x4 - core index']
  #allocation1 [shape = 'u32[144,128]{1,0:T(1,128)}', space=vmem, size = 0x12000, scoped, tag = 'internal scratch']
  #allocation2 [shape = 'f32[1,4]{1,0:T(1,128)}', space=vmem, size = 0x200, scoped, tag = 'scratch operand']
  %s0 = inlined_call_operand.hbm [shape: f32[2,4,256], index: 0, kind: input, shape index: {}]
  %s1 = inlined_call_operand.hbm [shape: f32[4,4], index: 1, kind: input, shape index: {}]
  %s2 = inlined_call_operand.vmem [shape: f32[1,4], index: 2, kind: input, shape index: {}]
  %s3 = inlined_call_operand.hbm [shape: f32[2,1,4], index: 3, kind: output, shape index: {}]
  %s4 = sld [smem:[#allocation0]]
  $region61: #{tpu_custom_call.1} parent=0
    _
  %s6 = ssub.s32 1, %s4
  %s7 = scalar_select 0, %s6, %s4
  $region1: #{tpu_custom_call.1} parent=0
    #allocation3 [shape = 'u8[8192]{0}', space=vmem, size = 0x2000, scoped, tag = 'input window, operand 0']
    #allocation4 [shape = 's32[2]{0}', space=sflag, size = 0x8, scoped, tag = 'scoped memory for tpu_custom_call.1']
    #allocation5 [shape = 's32[2]{0}', space=sflag, size = 0x8, scoped, tag = 'scoped memory for tpu_custom_call.1']
    #allocation6 [shape = 'u8[2048]{0}', space=vmem, size = 0x800, scoped, tag = 'input window, operand 1, single buffered']
    #allocation7 [shape = 's32[1]{0}', space=sflag, size = 0x4, scoped, tag = 'scoped memory for tpu_custom_call.1']
    #allocation8 [shape = 'u8[1024]{0}', space=vmem, size = 0x400, scoped, tag = 'output window, operand 0']
    %8 = vsyncpa [#allocation4], 0
    %s9 = scalar_lea.sflag [#allocation4], 1
    %10 = vsyncpa %s9, 0
    %11 = vsyncpa [#allocation7], 0
    %12 = vsyncpa [#allocation5], 0
    %s13 = scalar_lea.sflag [#allocation5], 1
    %14 = vsyncpa %s13, 0
    loop: start=0, step=1, limit=4
    $region2: #{tpu_custom_call.1} parent=1 // loop_pre_header
      _
    $region3: #{tpu_custom_call.1} parent=1 // loop_header
      %s16 = sphi 0, %s20
      %p17 = scmp.ge.s32.totalorder %s16, 4
      %s23 = sphi 0, %s35
      %s24 = sphi 0, %s31
      %s25 = sphi 0, %s23
      %s26 = sphi 0, %s24
      %s27 = sphi 0, %s25
      %s28 = sphi 0, %s26
      %s40 = sphi 0, %s42
      %s43 = sphi 0, %s40
      %s44 = sphi 0, %s43
      %s60 = sphi 0, %s44
      %s64 = sphi 0, %s64
      %s66 = sphi 0, %s64
      %s67 = sphi 0, %s66
      %s81 = sphi 0, %s67
      %s85 = sphi 0, %s85
      %s87 = sphi 0, %s85
      %s88 = sphi 0, %s87
      %s102 = sphi 0, %s88
      %s108 = sphi 0, %s110
      %s111 = sphi 0, %s108
      %s112 = sphi 0, %s111
      %s128 = sphi 0, %s112
    $region4: #{tpu_custom_call.1} parent=1 // loop_header_branch
      %19 = sbr.rel (%p17) target = $region8
    $region5: #{tpu_custom_call.1} parent=1 // loop_body
      %s21 = ssub.s32 %s16, 1
      %s22 = ssub.s32 %s16, 2
      %s29 = sadd.s32 1, %s24
      %p30 = scmp.ge.s32.totalorder %s29, 1
      %s31 = scalar_select %p30, 0, %s29
      %s32 = sadd.s32 1, %s23
      %s33 = scalar_select %p30, %s32, %s23
      %p34 = scmp.ge.s32.totalorder %s33, 2
      %s35 = scalar_select %p34, 0, %s33
      %s36 = ssub.s32 %s23, %s35
      %s37 = ssub.s32 %s24, %s31
      %s38 = sor.u32 %s36, %s37
      %p39 = scmp.eq.s32.totalorder %s38, 0
      %s41 = sadd.s32 %s40, 1
      %s42 = scalar_select %p39, %s40, %s41
      %p45 = pneg %p39
      %p46 = scmp.eq.s32.totalorder %s16, 1
      %p47 = por %p45, %p46
      %p48 = scmp.ne.s32.totalorder %s40, %s43
      %p49 = scmp.eq.s32.totalorder %s16, 0
      %p50 = por %p48, %p49
      %p51 = scmp.ne.s32.totalorder %s40, %s43
      %p52 = scmp.eq.s32.totalorder %s21, 1
      %p53 = por %p51, %p52
      %p54 = scmp.ne.s32.totalorder %s43, %s44
      %p55 = scmp.eq.s32.totalorder %s21, 0
      %p56 = por %p54, %p55
      %p57 = scmp.ne.s32.totalorder %s43, %s44
      %p58 = scmp.eq.s32.totalorder %s22, 1
      %p59 = por %p57, %p58
      %p61 = scmp.ne.s32.totalorder %s44, %s60
      %p62 = scmp.eq.s32.totalorder %s22, 0
      %p63 = por %p61, %p62
      %s65 = sadd.s32 %s64, 1
      %p68 = scmp.eq.s32.totalorder %s16, 1
      %p69 = scmp.ne.s32.totalorder %s64, %s66
      %p70 = scmp.eq.s32.totalorder %s16, 0
      %p71 = por %p69, %p70
      %p72 = scmp.ne.s32.totalorder %s64, %s66
      %p73 = scmp.eq.s32.totalorder %s21, 1
      %p74 = por %p72, %p73
      %p75 = scmp.ne.s32.totalorder %s66, %s67
      %p76 = scmp.eq.s32.totalorder %s21, 0
      %p77 = por %p75, %p76
      %p78 = scmp.ne.s32.totalorder %s66, %s67
      %p79 = scmp.eq.s32.totalorder %s22, 1
      %p80 = por %p78, %p79
      %p82 = scmp.ne.s32.totalorder %s67, %s81
      %p83 = scmp.eq.s32.totalorder %s22, 0
      %p84 = por %p82, %p83
      %s86 = sadd.s32 %s85, 1
      %p89 = scmp.eq.s32.totalorder %s16, 1
      %p90 = scmp.ne.s32.totalorder %s85, %s87
      %p91 = scmp.eq.s32.totalorder %s16, 0
      %p92 = por %p90, %p91
      %p93 = scmp.ne.s32.totalorder %s85, %s87
      %p94 = scmp.eq.s32.totalorder %s21, 1
      %p95 = por %p93, %p94
      %p96 = scmp.ne.s32.totalorder %s87, %s88
      %p97 = scmp.eq.s32.totalorder %s21, 0
      %p98 = por %p96, %p97
      %p99 = scmp.ne.s32.totalorder %s87, %s88
      %p100 = scmp.eq.s32.totalorder %s22, 1
      %p101 = por %p99, %p100
      %p103 = scmp.ne.s32.totalorder %s88, %s102
      %p104 = scmp.eq.s32.totalorder %s22, 0
      %p105 = por %p103, %p104
      %s106 = ssub.s32 %s23, %s35
      %p107 = scmp.eq.s32.totalorder %s106, 0
      %s109 = sadd.s32 %s108, 1
      %s110 = scalar_select %p107, %s108, %s109
      %p113 = pneg %p107
      %p114 = scmp.eq.s32.totalorder %s16, 1
      %p115 = por %p113, %p114
      %p116 = scmp.ne.s32.totalorder %s108, %s111
      %p117 = scmp.eq.s32.totalorder %s16, 0
      %p118 = por %p116, %p117
      %p119 = scmp.ne.s32.totalorder %s108, %s111
      %p120 = scmp.eq.s32.totalorder %s21, 1
      %p121 = por %p119, %p120
      %p122 = scmp.ne.s32.totalorder %s111, %s112
      %p123 = scmp.eq.s32.totalorder %s21, 0
      %p124 = por %p122, %p123
      %p125 = scmp.ne.s32.totalorder %s111, %s112
      %p126 = scmp.eq.s32.totalorder %s22, 1
      %p127 = por %p125, %p126
      %p129 = scmp.ne.s32.totalorder %s112, %s128
      %p130 = scmp.eq.s32.totalorder %s22, 0
      %p131 = por %p129, %p130
      %p132 = scmp.le.s32.totalorder 1, %s16
      %p133 = scmp.lt.s32.totalorder %s16, 3
      %p134 = pnand %p132, %p133
      %p135 = pneg %p134
      // Predicated region
      $region9: #{tpu_custom_call.1} parent=5 // pred_check
        _
      $region10: #{tpu_custom_call.1} parent=5 // pred_check_branch
        %137 = sbr.rel (%p134) target = $region12
      $region11: #{tpu_custom_call.1} parent=5 // pred_region
        %s138 = ssub.s32 %s16, 1
        // Predicated region
        $region13: #{tpu_custom_call.1} parent=11 // pred_check
          %p139 = pneg %p77
        $region14: #{tpu_custom_call.1} parent=11 // pred_check_branch
          %141 = sbr.rel (%p139) target = $region16
        $region15: #{tpu_custom_call.1} parent=11 // pred_region
          %s143 = ssub.s32 64, 64
          %144 = vsyncadd [#allocation7], %s143
          %s146 = sshll.u32 [#allocation6], 4
          %s147 = int_to_ptr.vmem [resolvable:$true] %s146
          %149 = dma.hbm_to_vmem [thread:$0]  %s1, 64, %s147, [#allocation7]
        $region16: #{tpu_custom_call.1} parent=11 // pred_fallthru
          _
        // Predicated region
        $region17: #{tpu_custom_call.1} parent=11 // pred_check
          %p150 = pneg %p98
        $region18: #{tpu_custom_call.1} parent=11 // pred_check_branch
          %152 = sbr.rel (%p150) target = $region20
        $region19: #{tpu_custom_call.1} parent=11 // pred_region
          _
        $region20: #{tpu_custom_call.1} parent=11 // pred_fallthru
          _
      $region12: #{tpu_custom_call.1} parent=5 // pred_fallthru
        _
      %p153 = scmp.lt.s32.totalorder %s16, 2
      // Predicated region
      $region21: #{tpu_custom_call.1} parent=5 // pred_check
        %p154 = pneg %p153
      $region22: #{tpu_custom_call.1} parent=5 // pred_check_branch
        %156 = sbr.rel (%p154) target = $region24
      $region23: #{tpu_custom_call.1} parent=5 // pred_region
        // Predicated region
        $region25: #{tpu_custom_call.1} parent=23 // pred_check
          %p157 = pneg %p50
        $region26: #{tpu_custom_call.1} parent=23 // pred_check_branch
          %159 = sbr.rel (%p157) target = $region28
        $region27: #{tpu_custom_call.1} parent=23 // pred_region
          %s160 = sand.u32 %s40, 1
          %s161 = scalar_lea.sflag [#allocation4], %s160
          %s162 = sand.u32 %s40, 1
          %s163 = smul.addr %s162, 8
          %s164 = scalar_lea.vmem [#allocation3], %s163
          %s166 = ssub.s32 128, 128
          %167 = vsyncadd %s161, %s166
          %s168 = smul.addr %s24, 2
          %s169 = smul.addr %s23, 2
          %s170 = sadd.s32 %s168, %s169
          %s171 = smul.addr %s170, 64
          %s172 = scalar_lea.hbm %s0, %s171
          %s174 = sshll.u32 %s164, 4
          %s175 = int_to_ptr.vmem [resolvable:$true] %s174
          %177 = dma.hbm_to_vmem [thread:$0]  %s172, 128, %s175, %s161
        $region28: #{tpu_custom_call.1} parent=23 // pred_fallthru
          _
      $region24: #{tpu_custom_call.1} parent=5 // pred_fallthru
        _
      %p178 = scmp.le.s32.totalorder 1, %s16
      %p179 = scmp.lt.s32.totalorder %s16, 3
      %p180 = pnand %p178, %p179
      %p181 = pneg %p180
      // Predicated region
      $region29: #{tpu_custom_call.1} parent=5 // pred_check
        _
      $region30: #{tpu_custom_call.1} parent=5 // pred_check_branch
        %183 = sbr.rel (%p180) target = $region32
      $region31: #{tpu_custom_call.1} parent=5 // pred_region
        %s184 = ssub.s32 %s16, 1
        %s185 = sand.u32 %s43, 1
        %s186 = scalar_lea.sflag [#allocation4], %s185
        %s187 = sand.u32 %s43, 1
        %s188 = smul.addr %s187, 8
        %s189 = scalar_lea.vmem [#allocation3], %s188
        // Predicated region
        $region33: #{tpu_custom_call.1} parent=31 // pred_check
          %p190 = pneg %p56
        $region34: #{tpu_custom_call.1} parent=31 // pred_check_branch
          %192 = sbr.rel (%p190) target = $region36
        $region35: #{tpu_custom_call.1} parent=31 // pred_region
          %193 = dma.done %s186, 128
        $region36: #{tpu_custom_call.1} parent=31 // pred_fallthru
          _
        // Predicated region
        $region37: #{tpu_custom_call.1} parent=31 // pred_check
          %p194 = pneg %p77
        $region38: #{tpu_custom_call.1} parent=31 // pred_check_branch
          %196 = sbr.rel (%p194) target = $region40
        $region39: #{tpu_custom_call.1} parent=31 // pred_region
          %197 = dma.done [#allocation7], 64
        $region40: #{tpu_custom_call.1} parent=31 // pred_fallthru
          _
        %s198 = sand.u32 %s43, 1
        %s199 = scalar_lea.sflag [#allocation4], %s198
        %s200 = sand.u32 %s43, 1
        %s201 = smul.addr %s200, 8
        %s202 = scalar_lea.vmem [#allocation3], %s201
        %p203 = pneg %p56
        %p204 = pneg %p53
        %p205 = pneg %p77
        %p206 = pneg %p74
        %p207 = pneg %p98
        %p208 = pneg %p95
        %p209 = pneg %p124
        %p210 = pneg %p121
        %s211 = sand.u32 %s111, 1
        %s212 = scalar_lea.sflag [#allocation5], %s211
        %s213 = sand.u32 %s111, 1
        %s214 = scalar_lea.vmem [#allocation8], %s213
        %p215 = scmp.eq.s32.totalorder %s26, 0
        // Predicated region
        $region41: #{tpu_custom_call.1} parent=31 // pred_check
          %p216 = pneg %p215
        $region42: #{tpu_custom_call.1} parent=31 // pred_check_branch
          %218 = sbr.rel (%p216) target = $region44
        $region43: #{tpu_custom_call.1} parent=31 // pred_region
          %vm219 = vcmask 24576
          %220 = vst.msk [vmem:[#allocation2] sm:$0x1] %vm219, 0.0
        $region44: #{tpu_custom_call.1} parent=31 // pred_fallthru
          _
        %v221 = vld [vmem:[%s189] sm:$0xff]
        %v223 = vcombine.high %v221, %v221
        %vm225 = vcmask 1043456
        %v226 = vsel %vm225, %v221, 0.0
        %v227 = vsel %vm225, %v223, 0.0
        %v228 = vadd.f32 %v226, %v227
        %229 = vadd.xlane.f32.xlu0 %v228
        %v230 = vpop.xlane.xlu0 %229
        %v231 = vld [vmem:[#allocation6] sm:$0xf]
        %v232 = vld [vmem:[#allocation2] sm:$0x1]
        %v234 = vlaneseq
        %v235 = vand.u32 %v234, 127
        %v236 = vlaneseq
        %v237 = vshrl.u32 %v236, 7
        %v238 = vsub.s32 %v235, %v237
        %v239 = vrot.slane %v230, %v238
        %vm240 = vcmask 31744
        %v241 = vsel %vm240, %v239, 0
        %v244 = vsel %vm225, %v231, 0
        %246 = vmatprep.subr.mxu0 0.0
        %247 = vmatpush1.msra.mxu0 %v244
        %248 = vmatprep.subr.mxu0 0.0
        %249 = vmatpush1.msra.mxu0 0.0
        %250 = vmatprep.subr.mxu0 0.0
        %251 = vmatpush1.msra.mxu0 0.0
        %252 = vmatprep.subr.mxu0 0.0
        %253 = vmatpush1.msra.mxu0 0.0
        %254 = vmatprep.subr.mxu0 0.0
        %255 = vmatpush1.msra.mxu0 0.0
        %256 = vmatprep.subr.mxu0 0.0
        %257 = vmatpush1.msra.mxu0 0.0
        %258 = vmatprep.subr.mxu0 0.0
        %259 = vmatpush1.msra.mxu0 0.0
        %260 = vmatprep.subr.mxu0 0.0
        %261 = vmatpush1.msra.mxu0 0.0
        %262 = vmatprep.subr.mxu0 0.0
        %263 = vmatpush1.msra.mxu0 0.0
        %264 = vmatprep.subr.mxu0 0.0
        %265 = vmatpush1.msra.mxu0 0.0
        %266 = vmatprep.subr.mxu0 0.0
        %267 = vmatpush1.msra.mxu0 0.0
        %268 = vmatprep.subr.mxu0 0.0
        %269 = vmatpush1.msra.mxu0 0.0
        %270 = vmatprep.subr.mxu0 0.0
        %271 = vmatpush1.msra.mxu0 0.0
        %272 = vmatprep.subr.mxu0 0.0
        %273 = vmatpush1.msra.mxu0 0.0
        %274 = vmatprep.subr.mxu0 0.0
        %275 = vmatpush1.msra.mxu0 0.0
        %276 = vmatprep.subr.mxu0 0.0
        %277 = vmatpush1.msra.mxu0 0.0
        %278 = vmatprep.subr.mxu0 0.0
        %279 = vmatpush1.msra.mxu0 0.0
        %280 = vmatprep.subr.mxu0 0.0
        %281 = vmatpush1.msra.mxu0 0.0
        %282 = vmatprep.subr.mxu0 0.0
        %283 = vmatpush1.msra.mxu0 0.0
        %284 = vmatprep.subr.mxu0 0.0
        %285 = vmatpush1.msra.mxu0 0.0
        %286 = vmatprep.subr.mxu0 0.0
        %287 = vmatpush1.msra.mxu0 0.0
        %288 = vmatprep.subr.mxu0 0.0
        %289 = vmatpush1.msra.mxu0 0.0
        %290 = vmatprep.subr.mxu0 0.0
        %291 = vmatpush1.msra.mxu0 0.0
        %292 = vmatprep.subr.mxu0 0.0
        %293 = vmatpush1.msra.mxu0 0.0
        %294 = vmatprep.subr.mxu0 0.0
        %295 = vmatpush1.msra.mxu0 0.0
        %296 = vmatprep.subr.mxu0 0.0
        %297 = vmatpush1.msra.mxu0 0.0
        %298 = vmatprep.subr.mxu0 0.0
        %299 = vmatpush1.msra.mxu0 0.0
        %300 = vmatprep.subr.mxu0 0.0
        %301 = vmatpush1.msra.mxu0 0.0
        %302 = vmatprep.subr.mxu0 0.0
        %303 = vmatpush1.msra.mxu0 0.0
        %304 = vmatprep.subr.mxu0 0.0
        %305 = vmatpush1.msra.mxu0 0.0
        %306 = vmatprep.subr.mxu0 0.0
        %307 = vmatpush1.msra.mxu0 0.0
        %308 = vmatprep.subr.mxu0 0.0
        %309 = vmatpush1.msra.mxu0 0.0
        %310 = vmatprep.mubr.f32.mxu0 0.0
        %311 = vmatmul.mubr.f32.gmra.mrb[0].mxu0 %v241
        %v312 = vpop.f32.mrb[0].mxu0
        %v313 = vadd.f32 0.0, %v312
        %v314 = vpop.f32.mrb[0].mxu0
        %315 = vdwg.mxu0
        %v316 = vadd.f32 %v232, %v313
        %vm317 = vcmask 24576
        %318 = vst.msk [vmem:[#allocation2] sm:$0x1] %vm317, %v316
        // Predicated region
        $region45: #{tpu_custom_call.1} parent=31 // pred_check
          %p319 = pneg %p215
        $region46: #{tpu_custom_call.1} parent=31 // pred_check_branch
          %321 = sbr.rel (%p319) target = $region48
        $region47: #{tpu_custom_call.1} parent=31 // pred_region
          %v322 = vld [vmem:[#allocation2] sm:$0x1]
          %v323 = vld [vmem:[%s2] sm:$0x1]
          %v324 = vadd.f32 %v322, %v323
          %v325 = vmax.f32 %v324, 0.0
          %326 = vst.msk [vmem:[%s214] sm:$0x1] %vm317, %v325
        $region48: #{tpu_custom_call.1} parent=31 // pred_fallthru
          _
        %s327 = sand.u32 %s111, 1
        %s328 = scalar_lea.sflag [#allocation5], %s327
        %s329 = sand.u32 %s111, 1
        %s330 = scalar_lea.vmem [#allocation8], %s329
        // Predicated region
        $region49: #{tpu_custom_call.1} parent=31 // pred_check
          %p331 = pneg %p121
        $region50: #{tpu_custom_call.1} parent=31 // pred_check_branch
          %333 = sbr.rel (%p331) target = $region52
        $region51: #{tpu_custom_call.1} parent=31 // pred_region
          %s335 = ssub.s32 16, 16
          %336 = vsyncadd %s328, %s335
          %s337 = smul.addr %s25, 16
          %s338 = scalar_lea.hbm %s3, %s337
          %s340 = sshll.u32 %s330, 4
          %s341 = int_to_ptr.vmem [resolvable:$true] %s340
          %343 = dma.vmem_to_hbm [thread:$0]  %s341, 16, %s338, %s328
        $region52: #{tpu_custom_call.1} parent=31 // pred_fallthru
          _
      $region32: #{tpu_custom_call.1} parent=5 // pred_fallthru
        _
      %p344 = scmp.le.s32.totalorder 2, %s16
      // Predicated region
      $region53: #{tpu_custom_call.1} parent=5 // pred_check
        %p345 = pneg %p344
      $region54: #{tpu_custom_call.1} parent=5 // pred_check_branch
        %347 = sbr.rel (%p345) target = $region56
      $region55: #{tpu_custom_call.1} parent=5 // pred_region
        %s348 = ssub.s32 %s16, 2
        // Predicated region
        $region57: #{tpu_custom_call.1} parent=55 // pred_check
          %p349 = pneg %p127
        $region58: #{tpu_custom_call.1} parent=55 // pred_check_branch
          %351 = sbr.rel (%p349) target = $region60
        $region59: #{tpu_custom_call.1} parent=55 // pred_region
          %s352 = sand.u32 %s112, 1
          %s353 = scalar_lea.sflag [#allocation5], %s352
          %s354 = sand.u32 %s112, 1
          %s355 = scalar_lea.vmem [#allocation8], %s354
          %356 = dma.done %s353, 16
        $region60: #{tpu_custom_call.1} parent=55 // pred_fallthru
          _
      $region56: #{tpu_custom_call.1} parent=5 // pred_fallthru
        _
    $region6: #{tpu_custom_call.1} parent=1 // loop_footer
      %s20 = sadd.s32 1, %s16
    $region7: #{tpu_custom_call.1} parent=1 // loop_footer_branch
      %15 = sbr.rel target = $region3
    $region8: #{tpu_custom_call.1} parent=1 // loop_exit
      _
    %357 = vsyncpa [#allocation4], 1
    %s358 = scalar_lea.sflag [#allocation4], 1
    %359 = vsyncpa %s358, 1
    %360 = vsyncpa [#allocation7], 1
    %361 = vsyncpa [#allocation5], 1
    %s362 = scalar_lea.sflag [#allocation5], 1
    %363 = vsyncpa %s362, 1

</llo_original>
